<compile_context>
chip_gen: v5e
topology: v5e:2x2
jax: 0.10.0
libtpu: 0.0.40
codegen_flags: <defaults>
</compile_context>

<pallas_src>
import functools
import math

import jax
import jax.numpy as jnp
from jax import lax
from jax.experimental import pallas as pl
from jax.experimental.pallas import tpu as pltpu


_NEG_BIG = -1e30  # only for padded (out-of-range) columns; exp() underflows to exactly 0


def _supervised_infonce_kernel(
    xr_ref,        # (TM, D)  row-tile features
    xc_ref,        # (TN, D)  column-tile features
    rlbl_ref,      # (TM, 1)  row-tile labels (int32)
    clbl_ref,      # (1, TN)  column-tile labels (int32)
    per_ex_ref,    # (TM, 1)  per-example logit-difference output
    rown_ref,      # (TM, D)  scratch: normalized row tile * (1/temperature)
    m_pos_ref, s_pos_ref, m_neg_ref, s_neg_ref,   # (TM, 1) online-LSE accumulators
    *, temperature, n_valid, block_m, block_n, col_padded,
):
    i = pl.program_id(0)
    k = pl.program_id(1)

    # ---- once per row tile: normalize rows (fold 1/temperature in via rsqrt) and
    #      reset the online-LSE accumulators.
    @pl.when(k == 0)
    def _init():
        xr = xr_ref[...].astype(jnp.float32)
        # max(||x||, 1e-12) semantics == clamp squared norm at 1e-24 before rsqrt
        inv = lax.rsqrt(jnp.maximum(jnp.sum(xr * xr, axis=-1, keepdims=True), 1e-24))
        rown_ref[...] = xr * (inv * (1.0 / temperature))
        m_pos_ref[...] = jnp.full_like(m_pos_ref, _NEG_BIG)
        s_pos_ref[...] = jnp.zeros_like(s_pos_ref)
        m_neg_ref[...] = jnp.full_like(m_neg_ref, _NEG_BIG)
        s_neg_ref[...] = jnp.zeros_like(s_neg_ref)

    # ---- normalize the column tile (plain L2, no temperature)
    xc = xc_ref[...].astype(jnp.float32)
    inv_c = lax.rsqrt(jnp.maximum(jnp.sum(xc * xc, axis=-1, keepdims=True), 1e-24))
    xcn = xc * inv_c

    # ---- similarity tile on the MXU (rows already scaled by 1/temperature)
    sim = lax.dot_general(
        rown_ref[...], xcn, (((1,), (1,)), ((), ())),
        preferred_element_type=jnp.float32,
    )                                                            # (TM, TN)

    # ---- masked logits via selects (no dense mask matrices)
    same = rlbl_ref[...] == clbl_ref[...]                        # (TM, TN) bool
    row_g = i * block_m + lax.broadcasted_iota(jnp.int32, sim.shape, 0)
    col_g = k * block_n + lax.broadcasted_iota(jnp.int32, sim.shape, 1)
    diag = row_g == col_g
    fallback = jnp.where(diag, 0.0, -1000.0)    # reference quirk: diagonal -> 0 in both
    pos_logits = jnp.where(same & (~diag), sim, fallback)
    neg_logits = jnp.where(~same, sim, fallback)
    if col_padded:
        valid = col_g < n_valid
        pos_logits = jnp.where(valid, pos_logits, _NEG_BIG)
        neg_logits = jnp.where(valid, neg_logits, _NEG_BIG)

    # ---- fused online logsumexp update for both matrices in one sweep over sim
    def _update(logits, m_ref, s_ref):
        m_new = jnp.maximum(m_ref[...], jnp.max(logits, axis=-1, keepdims=True))
        s_ref[...] = (s_ref[...] * jnp.exp(m_ref[...] - m_new)
                      + jnp.sum(jnp.exp(logits - m_new), axis=-1, keepdims=True))
        m_ref[...] = m_new

    _update(pos_logits, m_pos_ref, s_pos_ref)
    _update(neg_logits, m_neg_ref, s_neg_ref)

    # ---- finalize this row tile
    @pl.when(k == pl.num_programs(1) - 1)
    def _final():
        per_ex_ref[...] = ((m_pos_ref[...] + jnp.log(s_pos_ref[...]))
                           - (m_neg_ref[...] + jnp.log(s_neg_ref[...])))


def _round_up(x, m):
    return (x + m - 1) // m * m


def supervised_info_nce(features, target, temperature=0.07,
                        block_m=128, block_n=256):
    """features: (N, D) float, target: (N,) int labels. Returns scalar f32 loss."""
    n, d = features.shape

    # Tile sizes: sublane-aligned row tiles, lane-aligned column tiles, clipped for tiny N.
    tm = min(block_m, _round_up(n, 8))
    tn = min(block_n, _round_up(n, 128))
    n_pad = _round_up(n, math.lcm(tm, tn))

    feats = features.astype(jnp.float32)
    tgt = target.astype(jnp.int32)
    if n_pad != n:
        feats = jnp.pad(feats, ((0, n_pad - n), (0, 0)))
        tgt = jnp.pad(tgt, (0, n_pad - n), constant_values=-1)
    tcol = tgt.reshape(n_pad, 1)   # row-tile labels
    trow = tgt.reshape(1, n_pad)   # column-tile labels

    grid = (n_pad // tm, n_pad // tn)
    kernel = functools.partial(
        _supervised_infonce_kernel,
        temperature=float(temperature), n_valid=n,
        block_m=tm, block_n=tn, col_padded=(n_pad != n),
    )

    cost = pl.CostEstimate(
        flops=int(2 * n_pad * n_pad * d + 10 * n_pad * n_pad),
        transcendentals=int(2 * n_pad * n_pad),
        bytes_accessed=int(n_pad * d * 4 * (1 + grid[0]) + 3 * n_pad * 4),
    )

    per_ex = pl.pallas_call(
        kernel,
        out_shape=jax.ShapeDtypeStruct((n_pad, 1), jnp.float32),
        grid_spec=pltpu.PrefetchScalarGridSpec(
            num_scalar_prefetch=0,
            grid=grid,
            in_specs=[
                pl.BlockSpec((tm, d), lambda i, k: (i, 0)),   # row features
                pl.BlockSpec((tn, d), lambda i, k: (k, 0)),   # column features
                pl.BlockSpec((tm, 1), lambda i, k: (i, 0)),   # row labels
                pl.BlockSpec((1, tn), lambda i, k: (0, k)),   # column labels
            ],
            out_specs=pl.BlockSpec((tm, 1), lambda i, k: (i, 0)),
            scratch_shapes=[
                pltpu.VMEM((tm, d), jnp.float32),   # normalized + temperature-scaled rows
                pltpu.VMEM((tm, 1), jnp.float32),   # m_pos
                pltpu.VMEM((tm, 1), jnp.float32),   # s_pos
                pltpu.VMEM((tm, 1), jnp.float32),   # m_neg
                pltpu.VMEM((tm, 1), jnp.float32),   # s_neg
            ],
        ),
        compiler_params=pltpu.CompilerParams(
            dimension_semantics=("parallel", "arbitrary"),
        ),
        cost_estimate=cost,
    )(feats, feats, tcol, trow)

    # Final scalar reduction (tiny) done in XLA so row tiles stay megacore-parallel.
    return -jnp.mean(per_ex[:n, 0])


def _reference_loss(features, target, temperature=0.07):
    # pure-JAX reference mirroring the PyTorch module exactly
    x = features.astype(jnp.float32)
    norm = jnp.sqrt(jnp.sum(x * x, axis=-1, keepdims=True))
    x_n = x / jnp.maximum(norm, 1e-12)
    sim = (x_n @ x_n.T) / temperature
    mask = (target[:, None] == target[None, :]).astype(jnp.float32)
    eye = jnp.eye(mask.shape[0], dtype=jnp.float32)
    pos_mask = mask - eye
    neg_mask = 1.0 - mask
    pos_add = neg_mask * -1000.0
    neg_add = pos_mask * -1000.0
    per_ex = (jax.scipy.special.logsumexp(sim * pos_mask + pos_add, axis=-1)
              - jax.scipy.special.logsumexp(sim * neg_mask + neg_add, axis=-1))
    return -jnp.mean(per_ex)


if __name__ == "__main__":
    # Module has no learnable parameters; only temperature=0.07.
    # Small case (matches the module's toy scale).
    N, D = 8, 32
    kf, kt = jax.random.split(jax.random.PRNGKey(0))
    features = jax.random.normal(kf, (N, D), dtype=jnp.float32)
    target = jax.random.randint(kt, (N,), 0, 3, dtype=jnp.int32)

    loss = jax.block_until_ready(supervised_info_nce(features, target, temperature=0.07))
    ref = _reference_loss(features, target, temperature=0.07)
    assert jnp.allclose(loss, ref, atol=1e-4, rtol=1e-4), (loss, ref)

    # Larger, non-tile-aligned case exercising the multi-tile online-LSE path,
    # row/column padding and the masked padded columns.
    N2, D2 = 200, 64
    kf2, kt2 = jax.random.split(jax.random.PRNGKey(1))
    features2 = jax.random.normal(kf2, (N2, D2), dtype=jnp.float32)
    target2 = jax.random.randint(kt2, (N2,), 0, 7, dtype=jnp.int32)

    loss2 = jax.block_until_ready(
        supervised_info_nce(features2, target2, temperature=0.07, block_m=128, block_n=128))
    ref2 = _reference_loss(features2, target2, temperature=0.07)
    assert jnp.allclose(loss2, ref2, atol=1e-4, rtol=1e-4), (loss2, ref2)

    print("KERNEL_OK")
</pallas_src>

<mosaic_0001>
module attributes {stable_mosaic.version = 11 : i64} {
  func.func @_supervised_infonce_kernel(%arg0: i32, %arg1: i32, %arg2: memref<8x32xf32, #tpu.memory_space<vmem>>, %arg3: memref<128x32xf32, #tpu.memory_space<vmem>>, %arg4: memref<8x1xi32, #tpu.memory_space<vmem>>, %arg5: memref<1x128xi32, #tpu.memory_space<vmem>>, %arg6: memref<8x1xf32, #tpu.memory_space<vmem>>, %arg7: memref<8x32xf32, #tpu.memory_space<vmem>>, %arg8: memref<8x1xf32, #tpu.memory_space<vmem>>, %arg9: memref<8x1xf32, #tpu.memory_space<vmem>>, %arg10: memref<8x1xf32, #tpu.memory_space<vmem>>, %arg11: memref<8x1xf32, #tpu.memory_space<vmem>>) attributes {dimension_semantics = [#tpu.dimension_semantics<parallel>, #tpu.dimension_semantics<arbitrary>], iteration_bounds = array<i64: 16, 1>, scalar_prefetch = 0 : i64, scratch_operands = 5 : i64, tpu.core_type = #tpu.core_type<tc>, window_params = [{transform_indices = @transform_0, window_bounds = array<i64: 8, 32>}, {transform_indices = @transform_1, window_bounds = array<i64: 128, 32>}, {transform_indices = @transform_2, window_bounds = array<i64: 8, 1>}, {transform_indices = @transform_3, window_bounds = array<i64: 1, 128>}, {transform_indices = @transform_4, window_bounds = array<i64: 8, 1>}]} {
    %c0_i32 = arith.constant 0 : i32
    %0 = arith.cmpi eq, %arg1, %c0_i32 : i32
    %1 = arith.extui %0 : i1 to i32
    %c0_i32_0 = arith.constant 0 : i32
    %2 = arith.cmpi ne, %1, %c0_i32_0 : i32
    scf.if %2 {
      %c0_43 = arith.constant 0 : index
      %c0_44 = arith.constant 0 : index
      %79 = vector.load %arg2[%c0_43, %c0_44] : memref<8x32xf32, #tpu.memory_space<vmem>>, vector<8x32xf32>
      %80 = arith.mulf %79, %79 : vector<8x32xf32>
      %cst_45 = arith.constant dense<0.000000e+00> : vector<8xf32>
      %81 = vector.multi_reduction <add>, %80, %cst_45 [1] : vector<8x32xf32> to vector<8xf32>
      %82 = vector.shape_cast %81 : vector<8xf32> to vector<8x1xf32>
      %cst_46 = arith.constant 1.000000e-24 : f32
      %83 = vector.broadcast %cst_46 : f32 to vector<8x1xf32>
      %84 = arith.maximumf %82, %83 : vector<8x1xf32>
      %85 = math.rsqrt %84 : vector<8x1xf32>
      %cst_47 = arith.constant 14.2857141 : f32
      %86 = vector.broadcast %cst_47 : f32 to vector<8x1xf32>
      %87 = arith.mulf %85, %86 : vector<8x1xf32>
      %88 = vector.broadcast %87 : vector<8x1xf32> to vector<8x32xf32>
      %89 = arith.mulf %79, %88 : vector<8x32xf32>
      %c0_48 = arith.constant 0 : index
      %c0_49 = arith.constant 0 : index
      %90 = vector.load %arg7[%c0_48, %c0_49] : memref<8x32xf32, #tpu.memory_space<vmem>>, vector<8x32xf32>
      tpu.vector_store %arg7[%c0_48, %c0_49], %89 {strides = array<i32>} : memref<8x32xf32, #tpu.memory_space<vmem>>, vector<8x32xf32>,
      %cst_50 = arith.constant -1.000000e+30 : f32
      %91 = vector.broadcast %cst_50 : f32 to vector<8x1xf32>
      %c0_51 = arith.constant 0 : index
      %c0_52 = arith.constant 0 : index
      %92 = vector.load %arg8[%c0_51, %c0_52] : memref<8x1xf32, #tpu.memory_space<vmem>>, vector<8x1xf32>
      tpu.vector_store %arg8[%c0_51, %c0_52], %91 {strides = array<i32>} : memref<8x1xf32, #tpu.memory_space<vmem>>, vector<8x1xf32>,
      %cst_53 = arith.constant 0.000000e+00 : f32
      %93 = vector.broadcast %cst_53 : f32 to vector<8x1xf32>
      %c0_54 = arith.constant 0 : index
      %c0_55 = arith.constant 0 : index
      %94 = vector.load %arg9[%c0_54, %c0_55] : memref<8x1xf32, #tpu.memory_space<vmem>>, vector<8x1xf32>
      tpu.vector_store %arg9[%c0_54, %c0_55], %93 {strides = array<i32>} : memref<8x1xf32, #tpu.memory_space<vmem>>, vector<8x1xf32>,
      %cst_56 = arith.constant -1.000000e+30 : f32
      %95 = vector.broadcast %cst_56 : f32 to vector<8x1xf32>
      %c0_57 = arith.constant 0 : index
      %c0_58 = arith.constant 0 : index
      %96 = vector.load %arg10[%c0_57, %c0_58] : memref<8x1xf32, #tpu.memory_space<vmem>>, vector<8x1xf32>
      tpu.vector_store %arg10[%c0_57, %c0_58], %95 {strides = array<i32>} : memref<8x1xf32, #tpu.memory_space<vmem>>, vector<8x1xf32>,
      %cst_59 = arith.constant 0.000000e+00 : f32
      %97 = vector.broadcast %cst_59 : f32 to vector<8x1xf32>
      %c0_60 = arith.constant 0 : index
      %c0_61 = arith.constant 0 : index
      %98 = vector.load %arg11[%c0_60, %c0_61] : memref<8x1xf32, #tpu.memory_space<vmem>>, vector<8x1xf32>
      tpu.vector_store %arg11[%c0_60, %c0_61], %97 {strides = array<i32>} : memref<8x1xf32, #tpu.memory_space<vmem>>, vector<8x1xf32>,
    } else {
    }
    %c0 = arith.constant 0 : index
    %c0_1 = arith.constant 0 : index
    %3 = vector.load %arg3[%c0, %c0_1] : memref<128x32xf32, #tpu.memory_space<vmem>>, vector<128x32xf32>
    %4 = arith.mulf %3, %3 : vector<128x32xf32>
    %cst = arith.constant dense<0.000000e+00> : vector<128xf32>
    %5 = vector.multi_reduction <add>, %4, %cst [1] : vector<128x32xf32> to vector<128xf32>
    %6 = vector.shape_cast %5 : vector<128xf32> to vector<128x1xf32>
    %cst_2 = arith.constant 1.000000e-24 : f32
    %7 = vector.broadcast %cst_2 : f32 to vector<128x1xf32>
    %8 = arith.maximumf %6, %7 : vector<128x1xf32>
    %9 = math.rsqrt %8 : vector<128x1xf32>
    %10 = vector.broadcast %9 : vector<128x1xf32> to vector<128x32xf32>
    %11 = arith.mulf %3, %10 : vector<128x32xf32>
    %c0_3 = arith.constant 0 : index
    %c0_4 = arith.constant 0 : index
    %12 = vector.load %arg7[%c0_3, %c0_4] : memref<8x32xf32, #tpu.memory_space<vmem>>, vector<8x32xf32>
    %cst_5 = arith.constant dense<0.000000e+00> : vector<8x128xf32>
    %13 = tpu.matmul %12, %11, %cst_5 {dimension_numbers = #tpu.dot_dimension_numbers<[1], [1], [0], [0], [0, 0, 1, 0], [], []>} : vector<8x32xf32>, vector<128x32xf32>, vector<8x128xf32> -> vector<8x128xf32>
    %c0_6 = arith.constant 0 : index
    %c0_7 = arith.constant 0 : index
    %14 = vector.load %arg4[%c0_6, %c0_7] : memref<8x1xi32, #tpu.memory_space<vmem>>, vector<8x1xi32>
    %c0_8 = arith.constant 0 : index
    %c0_9 = arith.constant 0 : index
    %15 = vector.load %arg5[%c0_8, %c0_9] : memref<1x128xi32, #tpu.memory_space<vmem>>, vector<1x128xi32>
    %16 = vector.broadcast %14 : vector<8x1xi32> to vector<8x128xi32>
    %17 = vector.broadcast %15 : vector<1x128xi32> to vector<8x128xi32>
    %18 = arith.cmpi eq, %16, %17 : vector<8x128xi32>
    %c8_i32 = arith.constant 8 : i32
    %19 = arith.muli %arg0, %c8_i32 : i32
    %20 = tpu.iota {dimensions = array<i32: 0>} : vector<8x128xi32>
    %21 = vector.broadcast %19 : i32 to vector<8x128xi32>
    %22 = arith.addi %21, %20 : vector<8x128xi32>
    %c128_i32 = arith.constant 128 : i32
    %23 = arith.muli %arg1, %c128_i32 : i32
    %24 = tpu.iota {dimensions = array<i32: 1>} : vector<8x128xi32>
    %25 = vector.broadcast %23 : i32 to vector<8x128xi32>
    %26 = arith.addi %25, %24 : vector<8x128xi32>
    %27 = arith.cmpi eq, %22, %26 : vector<8x128xi32>
    %cst_10 = arith.constant 0.000000e+00 : f32
    %cst_11 = arith.constant -1.000000e+03 : f32
    %28 = vector.broadcast %cst_10 : f32 to vector<8x128xf32>
    %29 = vector.broadcast %cst_11 : f32 to vector<8x128xf32>
    %30 = arith.select %27, %28, %29 : vector<8x128xi1>, vector<8x128xf32>
    %cst_12 = arith.constant dense<true> : vector<8x128xi1>
    %31 = arith.xori %27, %cst_12 : vector<8x128xi1>
    %32 = arith.andi %18, %31 : vector<8x128xi1>
    %33 = arith.select %32, %13, %30 : vector<8x128xi1>, vector<8x128xf32>
    %cst_13 = arith.constant dense<true> : vector<8x128xi1>
    %34 = arith.xori %18, %cst_13 : vector<8x128xi1>
    %35 = arith.select %34, %13, %30 : vector<8x128xi1>, vector<8x128xf32>
    %c8_i32_14 = arith.constant 8 : i32
    %36 = vector.broadcast %c8_i32_14 : i32 to vector<8x128xi32>
    %37 = arith.cmpi slt, %26, %36 : vector<8x128xi32>
    %cst_15 = arith.constant -1.000000e+30 : f32
    %38 = vector.broadcast %cst_15 : f32 to vector<8x128xf32>
    %39 = arith.select %37, %33, %38 : vector<8x128xi1>, vector<8x128xf32>
    %cst_16 = arith.constant -1.000000e+30 : f32
    %40 = vector.broadcast %cst_16 : f32 to vector<8x128xf32>
    %41 = arith.select %37, %35, %40 : vector<8x128xi1>, vector<8x128xf32>
    %c0_17 = arith.constant 0 : index
    %c0_18 = arith.constant 0 : index
    %42 = vector.load %arg8[%c0_17, %c0_18] : memref<8x1xf32, #tpu.memory_space<vmem>>, vector<8x1xf32>
    %cst_19 = arith.constant dense<0xFF800000> : vector<8xf32>
    %43 = vector.multi_reduction <maximumf>, %39, %cst_19 [1] : vector<8x128xf32> to vector<8xf32>
    %44 = vector.shape_cast %43 : vector<8xf32> to vector<8x1xf32>
    %45 = arith.maximumf %42, %44 : vector<8x1xf32>
    %c0_20 = arith.constant 0 : index
    %c0_21 = arith.constant 0 : index
    %46 = vector.load %arg9[%c0_20, %c0_21] : memref<8x1xf32, #tpu.memory_space<vmem>>, vector<8x1xf32>
    %c0_22 = arith.constant 0 : index
    %c0_23 = arith.constant 0 : index
    %47 = vector.load %arg8[%c0_22, %c0_23] : memref<8x1xf32, #tpu.memory_space<vmem>>, vector<8x1xf32>
    %48 = arith.subf %47, %45 : vector<8x1xf32>
    %49 = math.exp %48 : vector<8x1xf32>
    %50 = arith.mulf %46, %49 : vector<8x1xf32>
    %51 = vector.broadcast %45 : vector<8x1xf32> to vector<8x128xf32>
    %52 = arith.subf %39, %51 : vector<8x128xf32>
    %53 = math.exp %52 : vector<8x128xf32>
    %cst_24 = arith.constant dense<0.000000e+00> : vector<8xf32>
    %54 = vector.multi_reduction <add>, %53, %cst_24 [1] : vector<8x128xf32> to vector<8xf32>
    %55 = vector.shape_cast %54 : vector<8xf32> to vector<8x1xf32>
    %56 = arith.addf %50, %55 : vector<8x1xf32>
    %c0_25 = arith.constant 0 : index
    %c0_26 = arith.constant 0 : index
    %57 = vector.load %arg9[%c0_25, %c0_26] : memref<8x1xf32, #tpu.memory_space<vmem>>, vector<8x1xf32>
    tpu.vector_store %arg9[%c0_25, %c0_26], %56 {strides = array<i32>} : memref<8x1xf32, #tpu.memory_space<vmem>>, vector<8x1xf32>,
    %c0_27 = arith.constant 0 : index
    %c0_28 = arith.constant 0 : index
    %58 = vector.load %arg8[%c0_27, %c0_28] : memref<8x1xf32, #tpu.memory_space<vmem>>, vector<8x1xf32>
    tpu.vector_store %arg8[%c0_27, %c0_28], %45 {strides = array<i32>} : memref<8x1xf32, #tpu.memory_space<vmem>>, vector<8x1xf32>,
    %c0_29 = arith.constant 0 : index
    %c0_30 = arith.constant 0 : index
    %59 = vector.load %arg10[%c0_29, %c0_30] : memref<8x1xf32, #tpu.memory_space<vmem>>, vector<8x1xf32>
    %cst_31 = arith.constant dense<0xFF800000> : vector<8xf32>
    %60 = vector.multi_reduction <maximumf>, %41, %cst_31 [1] : vector<8x128xf32> to vector<8xf32>
    %61 = vector.shape_cast %60 : vector<8xf32> to vector<8x1xf32>
    %62 = arith.maximumf %59, %61 : vector<8x1xf32>
    %c0_32 = arith.constant 0 : index
    %c0_33 = arith.constant 0 : index
    %63 = vector.load %arg11[%c0_32, %c0_33] : memref<8x1xf32, #tpu.memory_space<vmem>>, vector<8x1xf32>
    %c0_34 = arith.constant 0 : index
    %c0_35 = arith.constant 0 : index
    %64 = vector.load %arg10[%c0_34, %c0_35] : memref<8x1xf32, #tpu.memory_space<vmem>>, vector<8x1xf32>
    %65 = arith.subf %64, %62 : vector<8x1xf32>
    %66 = math.exp %65 : vector<8x1xf32>
    %67 = arith.mulf %63, %66 : vector<8x1xf32>
    %68 = vector.broadcast %62 : vector<8x1xf32> to vector<8x128xf32>
    %69 = arith.subf %41, %68 : vector<8x128xf32>
    %70 = math.exp %69 : vector<8x128xf32>
    %cst_36 = arith.constant dense<0.000000e+00> : vector<8xf32>
    %71 = vector.multi_reduction <add>, %70, %cst_36 [1] : vector<8x128xf32> to vector<8xf32>
    %72 = vector.shape_cast %71 : vector<8xf32> to vector<8x1xf32>
    %73 = arith.addf %67, %72 : vector<8x1xf32>
    %c0_37 = arith.constant 0 : index
    %c0_38 = arith.constant 0 : index
    %74 = vector.load %arg11[%c0_37, %c0_38] : memref<8x1xf32, #tpu.memory_space<vmem>>, vector<8x1xf32>
    tpu.vector_store %arg11[%c0_37, %c0_38], %73 {strides = array<i32>} : memref<8x1xf32, #tpu.memory_space<vmem>>, vector<8x1xf32>,
    %c0_39 = arith.constant 0 : index
    %c0_40 = arith.constant 0 : index
    %75 = vector.load %arg10[%c0_39, %c0_40] : memref<8x1xf32, #tpu.memory_space<vmem>>, vector<8x1xf32>
    tpu.vector_store %arg10[%c0_39, %c0_40], %62 {strides = array<i32>} : memref<8x1xf32, #tpu.memory_space<vmem>>, vector<8x1xf32>,
    %c0_i32_41 = arith.constant 0 : i32
    %76 = arith.cmpi eq, %arg1, %c0_i32_41 : i32
    %77 = arith.extui %76 : i1 to i32
    %c0_i32_42 = arith.constant 0 : i32
    %78 = arith.cmpi ne, %77, %c0_i32_42 : i32
    scf.if %78 {
      %c0_43 = arith.constant 0 : index
      %c0_44 = arith.constant 0 : index
      %79 = vector.load %arg8[%c0_43, %c0_44] : memref<8x1xf32, #tpu.memory_space<vmem>>, vector<8x1xf32>
      %c0_45 = arith.constant 0 : index
      %c0_46 = arith.constant 0 : index
      %80 = vector.load %arg9[%c0_45, %c0_46] : memref<8x1xf32, #tpu.memory_space<vmem>>, vector<8x1xf32>
      %81 = math.log %80 : vector<8x1xf32>
      %82 = arith.addf %79, %81 : vector<8x1xf32>
      %c0_47 = arith.constant 0 : index
      %c0_48 = arith.constant 0 : index
      %83 = vector.load %arg10[%c0_47, %c0_48] : memref<8x1xf32, #tpu.memory_space<vmem>>, vector<8x1xf32>
      %c0_49 = arith.constant 0 : index
      %c0_50 = arith.constant 0 : index
      %84 = vector.load %arg11[%c0_49, %c0_50] : memref<8x1xf32, #tpu.memory_space<vmem>>, vector<8x1xf32>
      %85 = math.log %84 : vector<8x1xf32>
      %86 = arith.addf %83, %85 : vector<8x1xf32>
      %87 = arith.subf %82, %86 : vector<8x1xf32>
      %c0_51 = arith.constant 0 : index
      %c0_52 = arith.constant 0 : index
      %88 = vector.load %arg6[%c0_51, %c0_52] : memref<8x1xf32, #tpu.memory_space<vmem>>, vector<8x1xf32>
      tpu.vector_store %arg6[%c0_51, %c0_52], %87 {strides = array<i32>} : memref<8x1xf32, #tpu.memory_space<vmem>>, vector<8x1xf32>,
    } else {
    }
    return
  }
  func.func @transform_0(%arg0: i32, %arg1: i32) -> (i32, i32) {
    %c0_i32 = arith.constant 0 : i32
    %c0_i32_0 = arith.constant 0 : i32
    return %arg0, %c0_i32 : i32, i32
  }
  func.func @transform_1(%arg0: i32, %arg1: i32) -> (i32, i32) {
    %c0_i32 = arith.constant 0 : i32
    %c0_i32_0 = arith.constant 0 : i32
    return %arg1, %c0_i32 : i32, i32
  }
  func.func @transform_2(%arg0: i32, %arg1: i32) -> (i32, i32) {
    %c0_i32 = arith.constant 0 : i32
    %c0_i32_0 = arith.constant 0 : i32
    return %arg0, %c0_i32 : i32, i32
  }
  func.func @transform_3(%arg0: i32, %arg1: i32) -> (i32, i32) {
    %c0_i32 = arith.constant 0 : i32
    %c0_i32_0 = arith.constant 0 : i32
    return %c0_i32, %arg1 : i32, i32
  }
  func.func @transform_4(%arg0: i32, %arg1: i32) -> (i32, i32) {
    %c0_i32 = arith.constant 0 : i32
    %c0_i32_0 = arith.constant 0 : i32
    return %arg0, %c0_i32 : i32, i32
  }
}

</mosaic_0001>

<llo_original>
// kernel: tpu_custom_call.1
$region0: #{tpu_custom_call.1}
  #allocation0 [shape = 'u32[]', space=smem, size = 0x4, offset = 0x4, fixed_abs, tag = 'smem constant byte address 0x4 - core index']
  #allocation1 [shape = 'u32[72,128]{1,0:T(1,128)}', space=vmem, size = 0x9000, scoped, tag = 'internal scratch']
  #allocation2 [shape = 'f32[8,32]{1,0:T(8,128)}', space=vmem, size = 0x1000, scoped, tag = 'scratch operand']
  #allocation3 [shape = 'f32[8,1]{1,0:T(8,128)}', space=vmem, size = 0x1000, scoped, tag = 'scratch operand']
  #allocation4 [shape = 'f32[8,1]{1,0:T(8,128)}', space=vmem, size = 0x1000, scoped, tag = 'scratch operand']
  #allocation5 [shape = 'f32[8,1]{1,0:T(8,128)}', space=vmem, size = 0x1000, scoped, tag = 'scratch operand']
  #allocation6 [shape = 'f32[8,1]{1,0:T(8,128)}', space=vmem, size = 0x1000, scoped, tag = 'scratch operand']
  %s0 = inlined_call_operand.vmem [shape: f32[128,32], index: 0, kind: input, shape index: {}]
  %s1 = inlined_call_operand.vmem [shape: f32[128,32], index: 1, kind: input, shape index: {}]
  %s2 = inlined_call_operand.vmem [shape: s32[128,1], index: 2, kind: input, shape index: {}]
  %s3 = inlined_call_operand.vmem [shape: s32[1,128], index: 3, kind: input, shape index: {}]
  %s4 = inlined_call_operand.vmem [shape: f32[128,1], index: 4, kind: output, shape index: {}]
  %s5 = sld [smem:[#allocation0]]
  $region57: #{tpu_custom_call.1} parent=0
    _
  %s7 = ssub.s32 1, %s5
  %s8 = scalar_select 0, %s7, %s5
  loop: start=0, step=1, limit=18
  $region2: #{tpu_custom_call.1} parent=0 // loop_pre_header
    _
  $region3: #{tpu_custom_call.1} parent=0 // loop_header
    %s10 = sphi 0, %s14
    %p11 = scmp.ge.s32.totalorder %s10, 18
    %s17 = sphi 0, %s29
    %s18 = sphi 0, %s25
    %s19 = sphi 0, %s17
    %s20 = sphi 0, %s18
    %s21 = sphi 0, %s19
    %s22 = sphi 0, %s20
    %s32 = sphi 0, %s34
    %s35 = sphi 0, %s32
    %s36 = sphi 0, %s35
    %s52 = sphi 0, %s36
    %s58 = sphi 0, %s60
    %s61 = sphi 0, %s58
    %s62 = sphi 0, %s61
    %s78 = sphi 0, %s62
    %s84 = sphi 0, %s86
    %s87 = sphi 0, %s84
    %s88 = sphi 0, %s87
    %s104 = sphi 0, %s88
    %s110 = sphi 0, %s112
    %s113 = sphi 0, %s110
    %s114 = sphi 0, %s113
    %s130 = sphi 0, %s114
    %s136 = sphi 0, %s138
    %s139 = sphi 0, %s136
    %s140 = sphi 0, %s139
    %s156 = sphi 0, %s140
  $region4: #{tpu_custom_call.1} parent=0 // loop_header_branch
    %13 = sbr.rel (%p11) target = $region8
  $region5: #{tpu_custom_call.1} parent=0 // loop_body
    %s15 = ssub.s32 %s10, 1
    %s16 = ssub.s32 %s10, 2
    %s23 = sadd.s32 1, %s18
    %p24 = scmp.ge.s32.totalorder %s23, 1
    %s25 = scalar_select %p24, 0, %s23
    %s26 = sadd.s32 1, %s17
    %s27 = scalar_select %p24, %s26, %s17
    %p28 = scmp.ge.s32.totalorder %s27, 16
    %s29 = scalar_select %p28, 0, %s27
    %s30 = ssub.s32 %s17, %s29
    %p31 = scmp.eq.s32.totalorder %s30, 0
    %s33 = sadd.s32 %s32, 1
    %s34 = scalar_select %p31, %s32, %s33
    %p37 = pneg %p31
    %p38 = scmp.eq.s32.totalorder %s10, 15
    %p39 = por %p37, %p38
    %p40 = scmp.ne.s32.totalorder %s32, %s35
    %p41 = scmp.eq.s32.totalorder %s10, 0
    %p42 = por %p40, %p41
    %p43 = scmp.ne.s32.totalorder %s32, %s35
    %p44 = scmp.eq.s32.totalorder %s15, 15
    %p45 = por %p43, %p44
    %p46 = scmp.ne.s32.totalorder %s35, %s36
    %p47 = scmp.eq.s32.totalorder %s15, 0
    %p48 = por %p46, %p47
    %p49 = scmp.ne.s32.totalorder %s35, %s36
    %p50 = scmp.eq.s32.totalorder %s16, 15
    %p51 = por %p49, %p50
    %p53 = scmp.ne.s32.totalorder %s36, %s52
    %p54 = scmp.eq.s32.totalorder %s16, 0
    %p55 = por %p53, %p54
    %s56 = ssub.s32 %s18, %s25
    %p57 = scmp.eq.s32.totalorder %s56, 0
    %s59 = sadd.s32 %s58, 1
    %s60 = scalar_select %p57, %s58, %s59
    %p63 = pneg %p57
    %p64 = scmp.eq.s32.totalorder %s10, 15
    %p65 = por %p63, %p64
    %p66 = scmp.ne.s32.totalorder %s58, %s61
    %p67 = scmp.eq.s32.totalorder %s10, 0
    %p68 = por %p66, %p67
    %p69 = scmp.ne.s32.totalorder %s58, %s61
    %p70 = scmp.eq.s32.totalorder %s15, 15
    %p71 = por %p69, %p70
    %p72 = scmp.ne.s32.totalorder %s61, %s62
    %p73 = scmp.eq.s32.totalorder %s15, 0
    %p74 = por %p72, %p73
    %p75 = scmp.ne.s32.totalorder %s61, %s62
    %p76 = scmp.eq.s32.totalorder %s16, 15
    %p77 = por %p75, %p76
    %p79 = scmp.ne.s32.totalorder %s62, %s78
    %p80 = scmp.eq.s32.totalorder %s16, 0
    %p81 = por %p79, %p80
    %s82 = ssub.s32 %s17, %s29
    %p83 = scmp.eq.s32.totalorder %s82, 0
    %s85 = sadd.s32 %s84, 1
    %s86 = scalar_select %p83, %s84, %s85
    %p89 = pneg %p83
    %p90 = scmp.eq.s32.totalorder %s10, 15
    %p91 = por %p89, %p90
    %p92 = scmp.ne.s32.totalorder %s84, %s87
    %p93 = scmp.eq.s32.totalorder %s10, 0
    %p94 = por %p92, %p93
    %p95 = scmp.ne.s32.totalorder %s84, %s87
    %p96 = scmp.eq.s32.totalorder %s15, 15
    %p97 = por %p95, %p96
    %p98 = scmp.ne.s32.totalorder %s87, %s88
    %p99 = scmp.eq.s32.totalorder %s15, 0
    %p100 = por %p98, %p99
    %p101 = scmp.ne.s32.totalorder %s87, %s88
    %p102 = scmp.eq.s32.totalorder %s16, 15
    %p103 = por %p101, %p102
    %p105 = scmp.ne.s32.totalorder %s88, %s104
    %p106 = scmp.eq.s32.totalorder %s16, 0
    %p107 = por %p105, %p106
    %s108 = ssub.s32 %s18, %s25
    %p109 = scmp.eq.s32.totalorder %s108, 0
    %s111 = sadd.s32 %s110, 1
    %s112 = scalar_select %p109, %s110, %s111
    %p115 = pneg %p109
    %p116 = scmp.eq.s32.totalorder %s10, 15
    %p117 = por %p115, %p116
    %p118 = scmp.ne.s32.totalorder %s110, %s113
    %p119 = scmp.eq.s32.totalorder %s10, 0
    %p120 = por %p118, %p119
    %p121 = scmp.ne.s32.totalorder %s110, %s113
    %p122 = scmp.eq.s32.totalorder %s15, 15
    %p123 = por %p121, %p122
    %p124 = scmp.ne.s32.totalorder %s113, %s114
    %p125 = scmp.eq.s32.totalorder %s15, 0
    %p126 = por %p124, %p125
    %p127 = scmp.ne.s32.totalorder %s113, %s114
    %p128 = scmp.eq.s32.totalorder %s16, 15
    %p129 = por %p127, %p128
    %p131 = scmp.ne.s32.totalorder %s114, %s130
    %p132 = scmp.eq.s32.totalorder %s16, 0
    %p133 = por %p131, %p132
    %s134 = ssub.s32 %s17, %s29
    %p135 = scmp.eq.s32.totalorder %s134, 0
    %s137 = sadd.s32 %s136, 1
    %s138 = scalar_select %p135, %s136, %s137
    %p141 = pneg %p135
    %p142 = scmp.eq.s32.totalorder %s10, 15
    %p143 = por %p141, %p142
    %p144 = scmp.ne.s32.totalorder %s136, %s139
    %p145 = scmp.eq.s32.totalorder %s10, 0
    %p146 = por %p144, %p145
    %p147 = scmp.ne.s32.totalorder %s136, %s139
    %p148 = scmp.eq.s32.totalorder %s15, 15
    %p149 = por %p147, %p148
    %p150 = scmp.ne.s32.totalorder %s139, %s140
    %p151 = scmp.eq.s32.totalorder %s15, 0
    %p152 = por %p150, %p151
    %p153 = scmp.ne.s32.totalorder %s139, %s140
    %p154 = scmp.eq.s32.totalorder %s16, 15
    %p155 = por %p153, %p154
    %p157 = scmp.ne.s32.totalorder %s140, %s156
    %p158 = scmp.eq.s32.totalorder %s16, 0
    %p159 = por %p157, %p158
    %p160 = scmp.le.s32.totalorder 1, %s10
    %p161 = scmp.lt.s32.totalorder %s10, 17
    %p162 = pnand %p160, %p161
    %p163 = pneg %p162
    // Predicated region
    $region9: #{tpu_custom_call.1} parent=5 // pred_check
      _
    $region10: #{tpu_custom_call.1} parent=5 // pred_check_branch
      %165 = sbr.rel (%p162) target = $region12
    $region11: #{tpu_custom_call.1} parent=5 // pred_region
      %s166 = ssub.s32 %s10, 1
      // Predicated region
      $region13: #{tpu_custom_call.1} parent=11 // pred_check
        %p167 = pneg %p74
      $region14: #{tpu_custom_call.1} parent=11 // pred_check_branch
        %169 = sbr.rel (%p167) target = $region16
      $region15: #{tpu_custom_call.1} parent=11 // pred_region
        %s170 = smul.u32 16, %s20
        %p171 = scmp.lt.s32.totalorder %s170, 15
        %s172 = scalar_select %p171, %s170, 15
        %s173 = smul.addr %s172, 8
        %s174 = scalar_lea.vmem %s1, %s173
        %s175 = smul.u32 16, %s20
      $region16: #{tpu_custom_call.1} parent=11 // pred_fallthru
        _
      // Predicated region
      $region17: #{tpu_custom_call.1} parent=11 // pred_check
        %p176 = pneg %p126
      $region18: #{tpu_custom_call.1} parent=11 // pred_check_branch
        %178 = sbr.rel (%p176) target = $region20
      $region19: #{tpu_custom_call.1} parent=11 // pred_region
        %p179 = scmp.lt.s32.totalorder %s20, 0
        %s180 = scalar_select %p179, %s20, 0
        %s181 = scalar_lea.vmem %s3, %s180
      $region20: #{tpu_custom_call.1} parent=11 // pred_fallthru
        _
    $region12: #{tpu_custom_call.1} parent=5 // pred_fallthru
      _
    %p182 = scmp.lt.s32.totalorder %s10, 16
    // Predicated region
    $region21: #{tpu_custom_call.1} parent=5 // pred_check
      %p183 = pneg %p182
    $region22: #{tpu_custom_call.1} parent=5 // pred_check_branch
      %185 = sbr.rel (%p183) target = $region24
    $region23: #{tpu_custom_call.1} parent=5 // pred_region
      // Predicated region
      $region25: #{tpu_custom_call.1} parent=23 // pred_check
        %p186 = pneg %p42
      $region26: #{tpu_custom_call.1} parent=23 // pred_check_branch
        %188 = sbr.rel (%p186) target = $region28
      $region27: #{tpu_custom_call.1} parent=23 // pred_region
        %p189 = scmp.lt.s32.totalorder %s17, 15
        %s190 = scalar_select %p189, %s17, 15
        %s191 = smul.addr %s190, 8
        %s192 = scalar_lea.vmem %s0, %s191
      $region28: #{tpu_custom_call.1} parent=23 // pred_fallthru
        _
      // Predicated region
      $region29: #{tpu_custom_call.1} parent=23 // pred_check
        %p193 = pneg %p94
      $region30: #{tpu_custom_call.1} parent=23 // pred_check_branch
        %195 = sbr.rel (%p193) target = $region32
      $region31: #{tpu_custom_call.1} parent=23 // pred_region
        %p196 = scmp.lt.s32.totalorder %s17, 15
        %s197 = scalar_select %p196, %s17, 15
        %s198 = smul.addr %s197, 8
        %s199 = scalar_lea.vmem %s2, %s198
      $region32: #{tpu_custom_call.1} parent=23 // pred_fallthru
        _
    $region24: #{tpu_custom_call.1} parent=5 // pred_fallthru
      _
    %p200 = scmp.le.s32.totalorder 1, %s10
    %p201 = scmp.lt.s32.totalorder %s10, 17
    %p202 = pnand %p200, %p201
    %p203 = pneg %p202
    // Predicated region
    $region33: #{tpu_custom_call.1} parent=5 // pred_check
      _
    $region34: #{tpu_custom_call.1} parent=5 // pred_check_branch
      %205 = sbr.rel (%p202) target = $region36
    $region35: #{tpu_custom_call.1} parent=5 // pred_region
      %s206 = ssub.s32 %s10, 1
      %p207 = scmp.lt.s32.totalorder %s19, 15
      %s208 = scalar_select %p207, %s19, 15
      %s209 = smul.addr %s208, 8
      %s210 = scalar_lea.vmem %s0, %s209
      %p211 = pneg %p48
      %p212 = pneg %p45
      %s213 = smul.u32 16, %s20
      %p214 = scmp.lt.s32.totalorder %s213, 15
      %s215 = scalar_select %p214, %s213, 15
      %s216 = smul.addr %s215, 8
      %s217 = scalar_lea.vmem %s1, %s216
      %p218 = pneg %p74
      %p219 = pneg %p71
      %p220 = scmp.lt.s32.totalorder %s19, 15
      %s221 = scalar_select %p220, %s19, 15
      %s222 = smul.addr %s221, 8
      %s223 = scalar_lea.vmem %s2, %s222
      %p224 = pneg %p100
      %p225 = pneg %p97
      %p226 = scmp.lt.s32.totalorder %s20, 0
      %s227 = scalar_select %p226, %s20, 0
      %s228 = scalar_lea.vmem %s3, %s227
      %p229 = pneg %p126
      %p230 = pneg %p123
      %p231 = pneg %p152
      %p232 = pneg %p149
      %p233 = scmp.lt.s32.totalorder %s19, 15
      %s234 = scalar_select %p233, %s19, 15
      %s235 = smul.addr %s234, 8
      %s236 = scalar_lea.vmem %s4, %s235
      %p237 = scmp.lt.s32.totalorder %s19, 15
      %s238 = scalar_select %p237, %s19, 15
      %s239 = smul.addr %s238, 8
      %s240 = scalar_lea.vmem %s0, %s239
      %s241 = smul.u32 16, %s20
      %p242 = scmp.lt.s32.totalorder %s241, 15
      %s243 = scalar_select %p242, %s241, 15
      %s244 = smul.addr %s243, 8
      %s245 = scalar_lea.vmem %s1, %s244
      %s246 = smul.u32 16, %s20
      %p247 = scmp.lt.s32.totalorder %s19, 15
      %s248 = scalar_select %p247, %s19, 15
      %s249 = smul.addr %s248, 8
      %s250 = scalar_lea.vmem %s2, %s249
      %p251 = scmp.lt.s32.totalorder %s20, 0
      %s252 = scalar_select %p251, %s20, 0
      %s253 = scalar_lea.vmem %s3, %s252
      %p254 = scmp.lt.s32.totalorder %s19, 15
      %s255 = scalar_select %p254, %s19, 15
      %s256 = smul.addr %s255, 8
      %s257 = scalar_lea.vmem %s4, %s256
      %p258 = scmp.eq.s32.totalorder %s20, 0
      // Predicated region
      $region37: #{tpu_custom_call.1} parent=35 // pred_check
        %p259 = pneg %p258
      $region38: #{tpu_custom_call.1} parent=35 // pred_check_branch
        %261 = sbr.rel (%p259) target = $region40
      $region39: #{tpu_custom_call.1} parent=35 // pred_region
        %v262 = vld [vmem:[%s240] sm:$0xff]
        %v263 = vmul.f32 %v262, %v262
        %vm264 = vcmask 261120
        %v265 = vsel %vm264, %v263, 0.0
        %266 = vadd.xlane.f32.xlu0 %v265
        %v267 = vpop.xlane.xlu0 %266
        %v268 = vmax.f32 %v267, 1e-24
        %v269 = vrsqrt.pop %v268
        %v270 = vmul.f32 %v269, %v268
        %v271 = vmul.f32 %v270, %v269
        %v272 = vmul.f32 0.5, %v271
        %v273 = vsub.f32 1.5, %v272
        %v274 = vmul.f32 %v269, %v273
        %vm275 = vweird.f32 %v268
        %vm276 = vweird.f32 %v269
        %vm277 = vmor %vm275, %vm276
        %v278 = vsel %vm277, %v269, %v274
        %v279 = vmul.f32 %v278, 14.285714
        %v280 = vmul.f32 %v262, %v279
        %281 = vst.msk [vmem:[#allocation2] sm:$0xff] %vm264, %v280
        %vm282 = vcmask 7168
        %283 = vst.msk [vmem:[#allocation3] sm:$0xff] %vm282, -1e+30
        %284 = vst.msk [vmem:[#allocation4] sm:$0xff] %vm282, 0.0
        %285 = vst.msk [vmem:[#allocation5] sm:$0xff] %vm282, -1e+30
        %286 = vst.msk [vmem:[#allocation6] sm:$0xff] %vm282, 0.0
      $region40: #{tpu_custom_call.1} parent=35 // pred_fallthru
        _
      %v287 = vld [vmem:[%s245] sm:$0xff]
      %v288 = vld [vmem:[%s245 + $0x8] sm:$0xff]
      %v289 = vld [vmem:[%s245 + $0x10] sm:$0xff]
      %v290 = vld [vmem:[%s245 + $0x18] sm:$0xff]
      %v291 = vld [vmem:[%s245 + $0x20] sm:$0xff]
      %v292 = vld [vmem:[%s245 + $0x28] sm:$0xff]
      %v293 = vld [vmem:[%s245 + $0x30] sm:$0xff]
      %v294 = vld [vmem:[%s245 + $0x38] sm:$0xff]
      %v295 = vld [vmem:[%s245 + $0x40] sm:$0xff]
      %v296 = vld [vmem:[%s245 + $0x48] sm:$0xff]
      %v297 = vld [vmem:[%s245 + $0x50] sm:$0xff]
      %v298 = vld [vmem:[%s245 + $0x58] sm:$0xff]
      %v299 = vld [vmem:[%s245 + $0x60] sm:$0xff]
      %v300 = vld [vmem:[%s245 + $0x68] sm:$0xff]
      %v301 = vld [vmem:[%s245 + $0x70] sm:$0xff]
      %v302 = vld [vmem:[%s245 + $0x78] sm:$0xff]
      %v303 = vmul.f32 %v287, %v287
      %v304 = vmul.f32 %v288, %v288
      %v305 = vmul.f32 %v289, %v289
      %v306 = vmul.f32 %v290, %v290
      %v307 = vmul.f32 %v291, %v291
      %v308 = vmul.f32 %v292, %v292
      %v309 = vmul.f32 %v293, %v293
      %v310 = vmul.f32 %v294, %v294
      %v311 = vmul.f32 %v295, %v295
      %v312 = vmul.f32 %v296, %v296
      %v313 = vmul.f32 %v297, %v297
      %v314 = vmul.f32 %v298, %v298
      %v315 = vmul.f32 %v299, %v299
      %v316 = vmul.f32 %v300, %v300
      %v317 = vmul.f32 %v301, %v301
      %v318 = vmul.f32 %v302, %v302
      %vm319 = vcmask 261120
      %v320 = vsel %vm319, %v303, 0.0
      %321 = vadd.xlane.f32.xlu0 %v320
      %v322 = vpop.xlane.xlu0 %321
      %v323 = vsel %vm319, %v304, 0.0
      %324 = vadd.xlane.f32.xlu0 %v323
      %v325 = vpop.xlane.xlu0 %324
      %v326 = vsel %vm319, %v305, 0.0
      %327 = vadd.xlane.f32.xlu0 %v326
      %v328 = vpop.xlane.xlu0 %327
      %v329 = vsel %vm319, %v306, 0.0
      %330 = vadd.xlane.f32.xlu0 %v329
      %v331 = vpop.xlane.xlu0 %330
      %v332 = vsel %vm319, %v307, 0.0
      %333 = vadd.xlane.f32.xlu0 %v332
      %v334 = vpop.xlane.xlu0 %333
      %v335 = vsel %vm319, %v308, 0.0
      %336 = vadd.xlane.f32.xlu0 %v335
      %v337 = vpop.xlane.xlu0 %336
      %v338 = vsel %vm319, %v309, 0.0
      %339 = vadd.xlane.f32.xlu0 %v338
      %v340 = vpop.xlane.xlu0 %339
      %v341 = vsel %vm319, %v310, 0.0
      %342 = vadd.xlane.f32.xlu0 %v341
      %v343 = vpop.xlane.xlu0 %342
      %v344 = vsel %vm319, %v311, 0.0
      %345 = vadd.xlane.f32.xlu0 %v344
      %v346 = vpop.xlane.xlu0 %345
      %v347 = vsel %vm319, %v312, 0.0
      %348 = vadd.xlane.f32.xlu0 %v347
      %v349 = vpop.xlane.xlu0 %348
      %v350 = vsel %vm319, %v313, 0.0
      %351 = vadd.xlane.f32.xlu0 %v350
      %v352 = vpop.xlane.xlu0 %351
      %v353 = vsel %vm319, %v314, 0.0
      %354 = vadd.xlane.f32.xlu0 %v353
      %v355 = vpop.xlane.xlu0 %354
      %v356 = vsel %vm319, %v315, 0.0
      %357 = vadd.xlane.f32.xlu0 %v356
      %v358 = vpop.xlane.xlu0 %357
      %v359 = vsel %vm319, %v316, 0.0
      %360 = vadd.xlane.f32.xlu0 %v359
      %v361 = vpop.xlane.xlu0 %360
      %v362 = vsel %vm319, %v317, 0.0
      %363 = vadd.xlane.f32.xlu0 %v362
      %v364 = vpop.xlane.xlu0 %363
      %v365 = vsel %vm319, %v318, 0.0
      %366 = vadd.xlane.f32.xlu0 %v365
      %v367 = vpop.xlane.xlu0 %366
      %v368 = vmax.f32 %v322, 1e-24
      %v369 = vmax.f32 %v325, 1e-24
      %v370 = vmax.f32 %v328, 1e-24
      %v371 = vmax.f32 %v331, 1e-24
      %v372 = vmax.f32 %v334, 1e-24
      %v373 = vmax.f32 %v337, 1e-24
      %v374 = vmax.f32 %v340, 1e-24
      %v375 = vmax.f32 %v343, 1e-24
      %v376 = vmax.f32 %v346, 1e-24
      %v377 = vmax.f32 %v349, 1e-24
      %v378 = vmax.f32 %v352, 1e-24
      %v379 = vmax.f32 %v355, 1e-24
      %v380 = vmax.f32 %v358, 1e-24
      %v381 = vmax.f32 %v361, 1e-24
      %v382 = vmax.f32 %v364, 1e-24
      %v383 = vmax.f32 %v367, 1e-24
      %v384 = vrsqrt.pop %v368
      %v385 = vmul.f32 %v384, %v368
      %v386 = vmul.f32 %v385, %v384
      %v387 = vmul.f32 0.5, %v386
      %v388 = vsub.f32 1.5, %v387
      %v389 = vmul.f32 %v384, %v388
      %vm390 = vweird.f32 %v368
      %vm391 = vweird.f32 %v384
      %vm392 = vmor %vm390, %vm391
      %v393 = vsel %vm392, %v384, %v389
      %v394 = vrsqrt.pop %v369
      %v395 = vmul.f32 %v394, %v369
      %v396 = vmul.f32 %v395, %v394
      %v397 = vmul.f32 0.5, %v396
      %v398 = vsub.f32 1.5, %v397
      %v399 = vmul.f32 %v394, %v398
      %vm400 = vweird.f32 %v369
      %vm401 = vweird.f32 %v394
      %vm402 = vmor %vm400, %vm401
      %v403 = vsel %vm402, %v394, %v399
      %v404 = vrsqrt.pop %v370
      %v405 = vmul.f32 %v404, %v370
      %v406 = vmul.f32 %v405, %v404
      %v407 = vmul.f32 0.5, %v406
      %v408 = vsub.f32 1.5, %v407
      %v409 = vmul.f32 %v404, %v408
      %vm410 = vweird.f32 %v370
      %vm411 = vweird.f32 %v404
      %vm412 = vmor %vm410, %vm411
      %v413 = vsel %vm412, %v404, %v409
      %v414 = vrsqrt.pop %v371
      %v415 = vmul.f32 %v414, %v371
      %v416 = vmul.f32 %v415, %v414
      %v417 = vmul.f32 0.5, %v416
      %v418 = vsub.f32 1.5, %v417
      %v419 = vmul.f32 %v414, %v418
      %vm420 = vweird.f32 %v371
      %vm421 = vweird.f32 %v414
      %vm422 = vmor %vm420, %vm421
      %v423 = vsel %vm422, %v414, %v419
      %v424 = vrsqrt.pop %v372
      %v425 = vmul.f32 %v424, %v372
      %v426 = vmul.f32 %v425, %v424
      %v427 = vmul.f32 0.5, %v426
      %v428 = vsub.f32 1.5, %v427
      %v429 = vmul.f32 %v424, %v428
      %vm430 = vweird.f32 %v372
      %vm431 = vweird.f32 %v424
      %vm432 = vmor %vm430, %vm431
      %v433 = vsel %vm432, %v424, %v429
      %v434 = vrsqrt.pop %v373
      %v435 = vmul.f32 %v434, %v373
      %v436 = vmul.f32 %v435, %v434
      %v437 = vmul.f32 0.5, %v436
      %v438 = vsub.f32 1.5, %v437
      %v439 = vmul.f32 %v434, %v438
      %vm440 = vweird.f32 %v373
      %vm441 = vweird.f32 %v434
      %vm442 = vmor %vm440, %vm441
      %v443 = vsel %vm442, %v434, %v439
      %v444 = vrsqrt.pop %v374
      %v445 = vmul.f32 %v444, %v374
      %v446 = vmul.f32 %v445, %v444
      %v447 = vmul.f32 0.5, %v446
      %v448 = vsub.f32 1.5, %v447
      %v449 = vmul.f32 %v444, %v448
      %vm450 = vweird.f32 %v374
      %vm451 = vweird.f32 %v444
      %vm452 = vmor %vm450, %vm451
      %v453 = vsel %vm452, %v444, %v449
      %v454 = vrsqrt.pop %v375
      %v455 = vmul.f32 %v454, %v375
      %v456 = vmul.f32 %v455, %v454
      %v457 = vmul.f32 0.5, %v456
      %v458 = vsub.f32 1.5, %v457
      %v459 = vmul.f32 %v454, %v458
      %vm460 = vweird.f32 %v375
      %vm461 = vweird.f32 %v454
      %vm462 = vmor %vm460, %vm461
      %v463 = vsel %vm462, %v454, %v459
      %v464 = vrsqrt.pop %v376
      %v465 = vmul.f32 %v464, %v376
      %v466 = vmul.f32 %v465, %v464
      %v467 = vmul.f32 0.5, %v466
      %v468 = vsub.f32 1.5, %v467
      %v469 = vmul.f32 %v464, %v468
      %vm470 = vweird.f32 %v376
      %vm471 = vweird.f32 %v464
      %vm472 = vmor %vm470, %vm471
      %v473 = vsel %vm472, %v464, %v469
      %v474 = vrsqrt.pop %v377
      %v475 = vmul.f32 %v474, %v377
      %v476 = vmul.f32 %v475, %v474
      %v477 = vmul.f32 0.5, %v476
      %v478 = vsub.f32 1.5, %v477
      %v479 = vmul.f32 %v474, %v478
      %vm480 = vweird.f32 %v377
      %vm481 = vweird.f32 %v474
      %vm482 = vmor %vm480, %vm481
      %v483 = vsel %vm482, %v474, %v479
      %v484 = vrsqrt.pop %v378
      %v485 = vmul.f32 %v484, %v378
      %v486 = vmul.f32 %v485, %v484
      %v487 = vmul.f32 0.5, %v486
      %v488 = vsub.f32 1.5, %v487
      %v489 = vmul.f32 %v484, %v488
      %vm490 = vweird.f32 %v378
      %vm491 = vweird.f32 %v484
      %vm492 = vmor %vm490, %vm491
      %v493 = vsel %vm492, %v484, %v489
      %v494 = vrsqrt.pop %v379
      %v495 = vmul.f32 %v494, %v379
      %v496 = vmul.f32 %v495, %v494
      %v497 = vmul.f32 0.5, %v496
      %v498 = vsub.f32 1.5, %v497
      %v499 = vmul.f32 %v494, %v498
      %vm500 = vweird.f32 %v379
      %vm501 = vweird.f32 %v494
      %vm502 = vmor %vm500, %vm501
      %v503 = vsel %vm502, %v494, %v499
      %v504 = vrsqrt.pop %v380
      %v505 = vmul.f32 %v504, %v380
      %v506 = vmul.f32 %v505, %v504
      %v507 = vmul.f32 0.5, %v506
      %v508 = vsub.f32 1.5, %v507
      %v509 = vmul.f32 %v504, %v508
      %vm510 = vweird.f32 %v380
      %vm511 = vweird.f32 %v504
      %vm512 = vmor %vm510, %vm511
      %v513 = vsel %vm512, %v504, %v509
      %v514 = vrsqrt.pop %v381
      %v515 = vmul.f32 %v514, %v381
      %v516 = vmul.f32 %v515, %v514
      %v517 = vmul.f32 0.5, %v516
      %v518 = vsub.f32 1.5, %v517
      %v519 = vmul.f32 %v514, %v518
      %vm520 = vweird.f32 %v381
      %vm521 = vweird.f32 %v514
      %vm522 = vmor %vm520, %vm521
      %v523 = vsel %vm522, %v514, %v519
      %v524 = vrsqrt.pop %v382
      %v525 = vmul.f32 %v524, %v382
      %v526 = vmul.f32 %v525, %v524
      %v527 = vmul.f32 0.5, %v526
      %v528 = vsub.f32 1.5, %v527
      %v529 = vmul.f32 %v524, %v528
      %vm530 = vweird.f32 %v382
      %vm531 = vweird.f32 %v524
      %vm532 = vmor %vm530, %vm531
      %v533 = vsel %vm532, %v524, %v529
      %v534 = vrsqrt.pop %v383
      %v535 = vmul.f32 %v534, %v383
      %v536 = vmul.f32 %v535, %v534
      %v537 = vmul.f32 0.5, %v536
      %v538 = vsub.f32 1.5, %v537
      %v539 = vmul.f32 %v534, %v538
      %vm540 = vweird.f32 %v383
      %vm541 = vweird.f32 %v534
      %vm542 = vmor %vm540, %vm541
      %v543 = vsel %vm542, %v534, %v539
      %v544 = vmul.f32 %v287, %v393
      %v545 = vmul.f32 %v288, %v403
      %v546 = vmul.f32 %v289, %v413
      %v547 = vmul.f32 %v290, %v423
      %v548 = vmul.f32 %v291, %v433
      %v549 = vmul.f32 %v292, %v443
      %v550 = vmul.f32 %v293, %v453
      %v551 = vmul.f32 %v294, %v463
      %v552 = vmul.f32 %v295, %v473
      %v553 = vmul.f32 %v296, %v483
      %v554 = vmul.f32 %v297, %v493
      %v555 = vmul.f32 %v298, %v503
      %v556 = vmul.f32 %v299, %v513
      %v557 = vmul.f32 %v300, %v523
      %v558 = vmul.f32 %v301, %v533
      %v559 = vmul.f32 %v302, %v543
      %v560 = vld [vmem:[#allocation2] sm:$0xff]
      %v562 = vsel %vm319, %v560, 0
      %v565 = vsel %vm319, %v544, 0
      %v568 = vsel %vm319, %v545, 0
      %v571 = vsel %vm319, %v546, 0
      %v574 = vsel %vm319, %v547, 0
      %v577 = vsel %vm319, %v548, 0
      %v580 = vsel %vm319, %v549, 0
      %v583 = vsel %vm319, %v550, 0
      %v586 = vsel %vm319, %v551, 0
      %v589 = vsel %vm319, %v552, 0
      %v592 = vsel %vm319, %v553, 0
      %v595 = vsel %vm319, %v554, 0
      %v598 = vsel %vm319, %v555, 0
      %v601 = vsel %vm319, %v556, 0
      %v604 = vsel %vm319, %v557, 0
      %v607 = vsel %vm319, %v558, 0
      %v610 = vsel %vm319, %v559, 0
      %612 = vmatpush.xpose.msra.mxu0 %v610
      %613 = vmatpush.xpose.msra.mxu0 %v607
      %614 = vmatpush.xpose.msra.mxu0 %v604
      %615 = vmatpush.xpose.msra.mxu0 %v601
      %616 = vmatpush.xpose.msra.mxu0 %v598
      %617 = vmatpush.xpose.msra.mxu0 %v595
      %618 = vmatpush.xpose.msra.mxu0 %v592
      %619 = vmatpush.xpose.msra.mxu0 %v589
      %620 = vmatpush.xpose.msra.mxu0 %v586
      %621 = vmatpush.xpose.msra.mxu0 %v583
      %622 = vmatpush.xpose.msra.mxu0 %v580
      %623 = vmatpush.xpose.msra.mxu0 %v577
      %624 = vmatpush.xpose.msra.mxu0 %v574
      %625 = vmatpush.xpose.msra.mxu0 %v571
      %626 = vmatpush.xpose.msra.mxu0 %v568
      %627 = vmatpush.xpose.msra.mxu0 %v565
      %628 = vmatmul.f32.gmra.mxu0 %v562
      %v629 = vpop.f32.mrf.mxu0
      %v630 = vadd.f32 0.0, %v629
      %631 = vdwg.mxu0
      %v632 = vld [vmem:[%s250] sm:$0xff]
      %v633 = vld [vmem:[%s253] sm:$0x1]
      %634 = vset.pattern.permute.xlu0 0
      %635 = vperm.xlu0 %634, %v632
      %v636 = vpop.permute.xlu0 %635
      %v637 = vperm.slane %v633, 0
      %vm638 = vcmp.eq.s32.totalorder %v636, %v637
      %s639 = smul.u32 %s19, 8
      %v640 = vlaneseq
      %v641 = vshrl.u32 %v640, 7
      %v642 = vstv %s639
      %v643 = vadd.s32 %v642, %v641
      %s644 = smul.u32 %s20, 128
      %v645 = vlaneseq
      %v646 = vand.u32 %v645, 127
      %v647 = vstv %s644
      %v648 = vadd.s32 %v647, %v646
      %vm649 = vcmp.eq.s32.totalorder %v643, %v648
      %v650 = vsel %vm649, 0.0, -1000.0
      %vm651 = vmxor %vm649, 1
      %vm652 = vmand %vm638, %vm651
      %v653 = vsel %vm652, %v630, %v650
      %vm654 = vmxor %vm638, 1
      %v655 = vsel %vm654, %v630, %v650
      %vm656 = vcmp.lt.s32.totalorder %v648, 8
      %v657 = vsel %vm656, %v653, -1e+30
      %v658 = vsel %vm656, %v655, -1e+30
      %v659 = vld [vmem:[#allocation3] sm:$0xff]
      %660 = vmax.xlane.f32.xlu0 %v657
      %v661 = vpop.xlane.xlu0 %660
      %v662 = vmax.f32 %v659, %v661
      %v663 = vld [vmem:[#allocation4] sm:$0xff]
      %v664 = vsub.f32 %v659, %v662
      %v665 = vmul.f32 %v664, 1.442695
      %v666 = vpow.pop %v665
      %v667 = vmul.f32 %v663, %v666
      %669 = vset.pattern.permute.xlu0 0
      %670 = vperm.xlu0 %669, %v662
      %v671 = vpop.permute.xlu0 %670
      %v673 = vsub.f32 %v657, %v671
      %v674 = vmul.f32 %v673, 1.442695
      %v675 = vpow.pop %v674
      %676 = vadd.xlane.f32.xlu0 %v675
      %v677 = vpop.xlane.xlu0 %676
      %v678 = vadd.f32 %v667, %v677
      %vm679 = vcmask 7168
      %680 = vst.msk [vmem:[#allocation4] sm:$0xff] %vm679, %v678
      %681 = vst.msk [vmem:[#allocation3] sm:$0xff] %vm679, %v662
      %v682 = vld [vmem:[#allocation5] sm:$0xff]
      %683 = vmax.xlane.f32.xlu0 %v658
      %v684 = vpop.xlane.xlu0 %683
      %v685 = vmax.f32 %v682, %v684
      %v686 = vld [vmem:[#allocation6] sm:$0xff]
      %v687 = vsub.f32 %v682, %v685
      %v688 = vmul.f32 %v687, 1.442695
      %v689 = vpow.pop %v688
      %v690 = vmul.f32 %v686, %v689
      %692 = vset.pattern.permute.xlu0 0
      %693 = vperm.xlu0 %692, %v685
      %v694 = vpop.permute.xlu0 %693
      %v696 = vsub.f32 %v658, %v694
      %v697 = vmul.f32 %v696, 1.442695
      %v698 = vpow.pop %v697
      %699 = vadd.xlane.f32.xlu0 %v698
      %v700 = vpop.xlane.xlu0 %699
      %v701 = vadd.f32 %v690, %v700
      %702 = vst.msk [vmem:[#allocation6] sm:$0xff] %vm679, %v701
      %703 = vst.msk [vmem:[#allocation5] sm:$0xff] %vm679, %v685
      // Predicated region
      $region41: #{tpu_custom_call.1} parent=35 // pred_check
        %p704 = pneg %p258
      $region42: #{tpu_custom_call.1} parent=35 // pred_check_branch
        %706 = sbr.rel (%p704) target = $region44
      $region43: #{tpu_custom_call.1} parent=35 // pred_region
        %v707 = vld [vmem:[#allocation3] sm:$0xff]
        %v708 = vld [vmem:[#allocation4] sm:$0xff]
        %v709 = vlog2.pop %v708
        %v710 = vmul.f32 %v709, 0.6931472
        %v711 = vadd.f32 %v707, %v710
        %v712 = vld [vmem:[#allocation5] sm:$0xff]
        %v713 = vld [vmem:[#allocation6] sm:$0xff]
        %v714 = vlog2.pop %v713
        %v715 = vmul.f32 %v714, 0.6931472
        %v716 = vadd.f32 %v712, %v715
        %v717 = vsub.f32 %v711, %v716
        %718 = vst.msk [vmem:[%s257] sm:$0xff] %vm679, %v717
      $region44: #{tpu_custom_call.1} parent=35 // pred_fallthru
        _
      %p719 = scmp.lt.s32.totalorder %s19, 15
      %s720 = scalar_select %p719, %s19, 15
      %s721 = smul.addr %s720, 8
      %s722 = scalar_lea.vmem %s4, %s721
      // Predicated region
      $region45: #{tpu_custom_call.1} parent=35 // pred_check
        %p723 = pneg %p149
      $region46: #{tpu_custom_call.1} parent=35 // pred_check_branch
        %725 = sbr.rel (%p723) target = $region48
      $region47: #{tpu_custom_call.1} parent=35 // pred_region
        _
      $region48: #{tpu_custom_call.1} parent=35 // pred_fallthru
        _
    $region36: #{tpu_custom_call.1} parent=5 // pred_fallthru
      _
    %p726 = scmp.le.s32.totalorder 2, %s10
    // Predicated region
    $region49: #{tpu_custom_call.1} parent=5 // pred_check
      %p727 = pneg %p726
    $region50: #{tpu_custom_call.1} parent=5 // pred_check_branch
      %729 = sbr.rel (%p727) target = $region52
    $region51: #{tpu_custom_call.1} parent=5 // pred_region
      %s730 = ssub.s32 %s10, 2
      // Predicated region
      $region53: #{tpu_custom_call.1} parent=51 // pred_check
        %p731 = pneg %p155
      $region54: #{tpu_custom_call.1} parent=51 // pred_check_branch
        %733 = sbr.rel (%p731) target = $region56
      $region55: #{tpu_custom_call.1} parent=51 // pred_region
        %p734 = scmp.lt.s32.totalorder %s21, 15
        %s735 = scalar_select %p734, %s21, 15
        %s736 = smul.addr %s735, 8
        %s737 = scalar_lea.vmem %s4, %s736
      $region56: #{tpu_custom_call.1} parent=51 // pred_fallthru
        _
    $region52: #{tpu_custom_call.1} parent=5 // pred_fallthru
      _
  $region6: #{tpu_custom_call.1} parent=0 // loop_footer
    %s14 = sadd.s32 1, %s10
  $region7: #{tpu_custom_call.1} parent=0 // loop_footer_branch
    %9 = sbr.rel target = $region3
  $region8: #{tpu_custom_call.1} parent=0 // loop_exit
    _

</llo_original>
